<compile_context>
chip_gen: v7x
topology: tpu7x:2x2x1
jax: 0.10.0
libtpu: 0.0.40
codegen_flags: <defaults>
</compile_context>

<pallas_src>
import math

import jax
import jax.numpy as jnp
from jax.experimental import pallas as pl
from jax.experimental.pallas import tpu as pltpu


def _round_up(x, m):
    return ((x + m - 1) // m) * m


def _plan_n(N, tn):
    """Lane-dense N tiling: pad N to a multiple of 128 (done once on the weight)."""
    assert tn % 128 == 0
    n128 = _round_up(N, 128)
    if n128 <= tn:
        return n128, n128
    return tn, _round_up(N, tn)


def _plan_k(K, tk):
    """Pick a K tile that divides K when possible (no per-call K padding of x)."""
    if K <= tk:
        return K, K
    cand = (tk // 128) * 128
    while cand >= 128:
        if K % cand == 0:
            return cand, K
        cand -= 128
    tk_eff = (tk // 128) * 128
    return tk_eff, _round_up(K, tk_eff)


def _vmem_limit_bytes():
    """Generation-aware VMEM budget: ~56 MiB on v7x (64 MiB phys), ~100 MiB on v5e/v6e."""
    try:
        info = pltpu.get_tpu_info()
        cap = getattr(info, "vmem_capacity_bytes", None)
        if cap:
            return int(min(cap * 7 // 8, 100 * 1024 * 1024))
    except Exception:
        pass
    return 48 * 1024 * 1024  # safe on every generation


def _linear_bias_kernel(x_ref, w_ref, b_ref, o_ref, acc_ref):
    # grid = (M_blocks, N_blocks, K_blocks); K is the reduction axis (last, "arbitrary")
    k = pl.program_id(2)

    @pl.when(k == 0)
    def _():
        # fold the bias into the accumulator init -> finalize is a pure cast+store
        acc_ref[...] = jnp.broadcast_to(
            b_ref[...].astype(jnp.float32), acc_ref.shape
        )

    # single-pass bf16 MXU matmul with f32 accumulation.
    # x tile: (tm, tk), w tile (native layout): (tn, tk) -> contract dim 1 of both.
    acc_ref[...] += jax.lax.dot_general(
        x_ref[...].astype(jnp.bfloat16),
        w_ref[...].astype(jnp.bfloat16),
        dimension_numbers=(((1,), (1,)), ((), ())),
        preferred_element_type=jnp.float32,
    )

    @pl.when(k == pl.num_programs(2) - 1)
    def _():
        o_ref[...] = acc_ref[...].astype(o_ref.dtype)


def prepare_generator_params(weight, bias, *, tn=512, tk=1024):
    """One-time layout prep for the static nn.Linear parameters.

    weight: (out_dim, d_model)  -- kept in native PyTorch layout (no transpose)
    bias:   (out_dim,)
    Pads out_dim to a lane-dense multiple of 128 (and d_model only if no K tile divides it).
    Hoisted out of the per-call path so no HBM copies of W/b happen per forward.
    """
    N, K = weight.shape
    tn_eff, pad_N = _plan_n(N, tn)
    tk_eff, pad_K = _plan_k(K, tk)

    w = weight
    if pad_N != N or pad_K != K:
        w = jnp.pad(w, ((0, pad_N - N), (0, pad_K - K)))
    b = bias.reshape(1, N)
    if pad_N != N:
        b = jnp.pad(b, ((0, 0), (0, pad_N - N)))

    meta = dict(N=N, K=K, tn_eff=tn_eff, tk_eff=tk_eff, pad_N=pad_N, pad_K=pad_K)
    return w, b, meta


def generator_forward(x, w_prepped, b_prepped, meta, *, tm=512, out_dtype=None):
    """Equivalent of Generator.forward: x @ weight.T + bias, using prepared params."""
    orig_shape = x.shape
    K = meta["K"]
    N = meta["N"]
    tk_eff, tn_eff = meta["tk_eff"], meta["tn_eff"]
    pad_K, pad_N = meta["pad_K"], meta["pad_N"]
    assert orig_shape[-1] == K
    out_dtype = out_dtype or x.dtype

    rows = 1
    for d in orig_shape[:-1]:
        rows *= d
    M = rows
    x2 = x.reshape(M, K)

    # M tiling: full-dim block when it fits one tile (no pad), else tm (multiple of 8)
    if M <= tm:
        tm_eff, pad_M = M, M
    else:
        tm_eff = tm
        pad_M = _round_up(M, tm_eff)

    if pad_M != M or pad_K != K:
        x2 = jnp.pad(x2, ((0, pad_M - M), (0, pad_K - K)))

    grid = (pad_M // tm_eff, pad_N // tn_eff, pad_K // tk_eff)

    out = pl.pallas_call(
        _linear_bias_kernel,
        out_shape=jax.ShapeDtypeStruct((pad_M, pad_N), out_dtype),
        grid_spec=pltpu.PrefetchScalarGridSpec(
            num_scalar_prefetch=0,
            grid=grid,
            in_specs=[
                pl.BlockSpec((tm_eff, tk_eff), lambda i, j, k: (i, k)),
                pl.BlockSpec((tn_eff, tk_eff), lambda i, j, k: (j, k)),  # native (N, K)
                pl.BlockSpec((1, tn_eff), lambda i, j, k: (0, j)),
            ],
            out_specs=pl.BlockSpec((tm_eff, tn_eff), lambda i, j, k: (i, j)),
            scratch_shapes=[pltpu.VMEM((tm_eff, tn_eff), jnp.float32)],
        ),
        compiler_params=pltpu.CompilerParams(
            dimension_semantics=("parallel", "parallel", "arbitrary"),
            vmem_limit_bytes=_vmem_limit_bytes(),
        ),
    )(x2, w_prepped, b_prepped)

    if pad_M != M or pad_N != N:
        out = out[:M, :N]
    return out.reshape(orig_shape[:-1] + (N,))


if __name__ == "__main__":
    key = jax.random.PRNGKey(0)
    kx, kw, kb = jax.random.split(key, 3)

    # Shapes implied by Generator: d_model hidden, vocab tokens -> proj to vocab-1
    B, S, d_model, vocab = 2, 8, 32, 33
    out_dim = vocab - 1

    x = jax.random.normal(kx, (B, S, d_model), dtype=jnp.float32)

    # nn.Linear default init: U(-1/sqrt(fan_in), 1/sqrt(fan_in)) for weight and bias
    bound = 1.0 / math.sqrt(d_model)
    weight = jax.random.uniform(kw, (out_dim, d_model), jnp.float32, -bound, bound)
    bias = jax.random.uniform(kb, (out_dim,), jnp.float32, -bound, bound)

    # one-time parameter prep (padding / layout), then the hot-path forward
    w_p, b_p, meta = prepare_generator_params(weight, bias)
    out = generator_forward(x, w_p, b_p, meta)
    out = jax.block_until_ready(out)

    # reference mirrors the kernel numerics: bf16 operands on the MXU, f32 accumulation
    ref = (
        jnp.dot(
            x.astype(jnp.bfloat16).reshape(-1, d_model),
            weight.T.astype(jnp.bfloat16),
            preferred_element_type=jnp.float32,
        ).reshape(B, S, out_dim)
        + bias
    )

    assert out.shape == (B, S, out_dim)
    assert jnp.allclose(out.astype(jnp.float32), ref, atol=1e-2, rtol=1e-2), \
        "mismatch vs reference"

    print("KERNEL_OK")
</pallas_src>

<mosaic_0001>
module attributes {stable_mosaic.version = 11 : i64} {
  func.func @_linear_bias_kernel(%arg0: i32, %arg1: i32, %arg2: i32, %arg3: memref<16x32xf32, #tpu.memory_space<vmem>>, %arg4: memref<128x32xf32, #tpu.memory_space<vmem>>, %arg5: memref<1x128xf32, #tpu.memory_space<vmem>>, %arg6: memref<16x128xf32, #tpu.memory_space<vmem>>, %arg7: memref<16x128xf32, #tpu.memory_space<vmem>>) attributes {dimension_semantics = [#tpu.dimension_semantics<parallel>, #tpu.dimension_semantics<parallel>, #tpu.dimension_semantics<arbitrary>], iteration_bounds = array<i64: 1, 1, 1>, scalar_prefetch = 0 : i64, scratch_operands = 1 : i64, tpu.core_type = #tpu.core_type<tc>, window_params = [{transform_indices = @transform_0, window_bounds = array<i64: 16, 32>}, {transform_indices = @transform_1, window_bounds = array<i64: 128, 32>}, {transform_indices = @transform_2, window_bounds = array<i64: 1, 128>}, {transform_indices = @transform_3, window_bounds = array<i64: 16, 128>}]} {
    %c0_i32 = arith.constant 0 : i32
    %0 = arith.cmpi eq, %arg2, %c0_i32 : i32
    %1 = arith.extui %0 : i1 to i32
    %c0_i32_0 = arith.constant 0 : i32
    %2 = arith.cmpi ne, %1, %c0_i32_0 : i32
    scf.if %2 {
      %c0_10 = arith.constant 0 : index
      %c0_11 = arith.constant 0 : index
      %14 = vector.load %arg5[%c0_10, %c0_11] : memref<1x128xf32, #tpu.memory_space<vmem>>, vector<1x128xf32>
      %15 = vector.shape_cast %14 : vector<1x128xf32> to vector<1x128xf32>
      %16 = vector.broadcast %15 : vector<1x128xf32> to vector<16x128xf32>
      %c0_12 = arith.constant 0 : index
      %c0_13 = arith.constant 0 : index
      %17 = vector.load %arg7[%c0_12, %c0_13] : memref<16x128xf32, #tpu.memory_space<vmem>>, vector<16x128xf32>
      tpu.vector_store %arg7[%c0_12, %c0_13], %16 {strides = array<i32>} : memref<16x128xf32, #tpu.memory_space<vmem>>, vector<16x128xf32>,
    } else {
    }
    %c0 = arith.constant 0 : index
    %c0_1 = arith.constant 0 : index
    %3 = vector.load %arg7[%c0, %c0_1] : memref<16x128xf32, #tpu.memory_space<vmem>>, vector<16x128xf32>
    %c0_2 = arith.constant 0 : index
    %c0_3 = arith.constant 0 : index
    %4 = vector.load %arg3[%c0_2, %c0_3] : memref<16x32xf32, #tpu.memory_space<vmem>>, vector<16x32xf32>
    %5 = arith.truncf %4 : vector<16x32xf32> to vector<16x32xbf16>
    %c0_4 = arith.constant 0 : index
    %c0_5 = arith.constant 0 : index
    %6 = vector.load %arg4[%c0_4, %c0_5] : memref<128x32xf32, #tpu.memory_space<vmem>>, vector<128x32xf32>
    %7 = arith.truncf %6 : vector<128x32xf32> to vector<128x32xbf16>
    %cst = arith.constant dense<0.000000e+00> : vector<16x128xf32>
    %8 = tpu.matmul %5, %7, %cst {dimension_numbers = #tpu.dot_dimension_numbers<[1], [1], [0], [0], [0, 0, 1, 0], [], []>} : vector<16x32xbf16>, vector<128x32xbf16>, vector<16x128xf32> -> vector<16x128xf32>
    %9 = arith.addf %3, %8 : vector<16x128xf32>
    %c0_6 = arith.constant 0 : index
    %c0_7 = arith.constant 0 : index
    %10 = vector.load %arg7[%c0_6, %c0_7] : memref<16x128xf32, #tpu.memory_space<vmem>>, vector<16x128xf32>
    tpu.vector_store %arg7[%c0_6, %c0_7], %9 {strides = array<i32>} : memref<16x128xf32, #tpu.memory_space<vmem>>, vector<16x128xf32>,
    %c0_i32_8 = arith.constant 0 : i32
    %11 = arith.cmpi eq, %arg2, %c0_i32_8 : i32
    %12 = arith.extui %11 : i1 to i32
    %c0_i32_9 = arith.constant 0 : i32
    %13 = arith.cmpi ne, %12, %c0_i32_9 : i32
    scf.if %13 {
      %c0_10 = arith.constant 0 : index
      %c0_11 = arith.constant 0 : index
      %14 = vector.load %arg7[%c0_10, %c0_11] : memref<16x128xf32, #tpu.memory_space<vmem>>, vector<16x128xf32>
      %c0_12 = arith.constant 0 : index
      %c0_13 = arith.constant 0 : index
      %15 = vector.load %arg6[%c0_12, %c0_13] : memref<16x128xf32, #tpu.memory_space<vmem>>, vector<16x128xf32>
      tpu.vector_store %arg6[%c0_12, %c0_13], %14 {strides = array<i32>} : memref<16x128xf32, #tpu.memory_space<vmem>>, vector<16x128xf32>,
    } else {
    }
    return
  }
  func.func @transform_0(%arg0: i32, %arg1: i32, %arg2: i32) -> (i32, i32) {
    %c0_i32 = arith.constant 0 : i32
    return %arg0, %arg2 : i32, i32
  }
  func.func @transform_1(%arg0: i32, %arg1: i32, %arg2: i32) -> (i32, i32) {
    %c0_i32 = arith.constant 0 : i32
    return %arg1, %arg2 : i32, i32
  }
  func.func @transform_2(%arg0: i32, %arg1: i32, %arg2: i32) -> (i32, i32) {
    %c0_i32 = arith.constant 0 : i32
    %c0_i32_0 = arith.constant 0 : i32
    return %c0_i32, %arg1 : i32, i32
  }
  func.func @transform_3(%arg0: i32, %arg1: i32, %arg2: i32) -> (i32, i32) {
    %c0_i32 = arith.constant 0 : i32
    return %arg0, %arg1 : i32, i32
  }
}

</mosaic_0001>

<llo_original>
// kernel: tpu_custom_call.1
$region0: #{tpu_custom_call.1}
  #allocation0 [shape = 'u32[]', space=smem, size = 0x4, offset = 0x4, fixed_abs, tag = 'smem constant byte address 0x4 - core index']
  #allocation1 [shape = 'u32[144,128]{1,0:T(1,128)}', space=vmem, size = 0x12000, scoped, tag = 'internal scratch']
  #allocation2 [shape = 'f32[16,128]{1,0:T(8,128)}', space=vmem, size = 0x2000, scoped, tag = 'scratch operand']
  %s0 = inlined_call_operand.vmem [shape: f32[16,32], index: 0, kind: input, shape index: {}]
  %s1 = inlined_call_operand.vmem [shape: f32[128,32], index: 1, kind: input, shape index: {}]
  %s2 = inlined_call_operand.vmem [shape: f32[1,128], index: 2, kind: input, shape index: {}]
  %s3 = inlined_call_operand.hbm [shape: f32[16,128], index: 3, kind: output, shape index: {}]
  %s4 = sld [smem:[#allocation0]]
  $region30: #{tpu_custom_call.1} parent=0
    _
  %s6 = ssub.s32 1, %s4
  %s7 = scalar_select 0, %s6, %s4
  $region1: #{tpu_custom_call.1} parent=0
    #allocation3 [shape = 'u8[8192]{0}', space=vmem, size = 0x2000, scoped, tag = 'output window, operand 0, single buffered']
    #allocation4 [shape = 's32[1]{0}', space=sflag, size = 0x4, scoped, tag = 'scoped memory for tpu_custom_call.1']
    %8 = vsyncpa [#allocation4], 0
    // Predicated region
    $region2: #{tpu_custom_call.1} parent=1 // pred_check
      _
    $region3: #{tpu_custom_call.1} parent=1 // pred_check_branch
      %10 = sbr.rel (0) target = $region5
    $region4: #{tpu_custom_call.1} parent=1 // pred_region
      _
    $region5: #{tpu_custom_call.1} parent=1 // pred_fallthru
      _
    // Predicated region
    $region6: #{tpu_custom_call.1} parent=1 // pred_check
      _
    $region7: #{tpu_custom_call.1} parent=1 // pred_check_branch
      %12 = sbr.rel (0) target = $region9
    $region8: #{tpu_custom_call.1} parent=1 // pred_region
      _
    $region9: #{tpu_custom_call.1} parent=1 // pred_fallthru
      _
    // Predicated region
    $region10: #{tpu_custom_call.1} parent=1 // pred_check
      _
    $region11: #{tpu_custom_call.1} parent=1 // pred_check_branch
      %14 = sbr.rel (0) target = $region13
    $region12: #{tpu_custom_call.1} parent=1 // pred_region
      _
    $region13: #{tpu_custom_call.1} parent=1 // pred_fallthru
      _
    %p16 = scmp.eq.s32.totalorder 0, 0
    // Predicated region
    $region14: #{tpu_custom_call.1} parent=1 // pred_check
      %p17 = pneg %p16
    $region15: #{tpu_custom_call.1} parent=1 // pred_check_branch
      %19 = sbr.rel (%p17) target = $region17
    $region16: #{tpu_custom_call.1} parent=1 // pred_region
      %v20 = vld [vmem:[%s2] sm:$0x1]
      %v22 = vlaneseq
      %v23 = vshrl.u32 %v22, 7
      %v24 = vsub.s32 0, %v23
      %v25 = vrot.slane %v20, %v24
      %27 = vst [vmem:[#allocation2] sm:$0xff] %v25
      %28 = vst [vmem:[#allocation2 + $0x8] sm:$0xff] %v25
    $region17: #{tpu_custom_call.1} parent=1 // pred_fallthru
      _
    %v29 = vld [vmem:[#allocation2] sm:$0xff]
    %v30 = vld [vmem:[#allocation2 + $0x8] sm:$0xff]
    %v31 = vld [vmem:[%s0] sm:$0xff]
    %v32 = vld [vmem:[%s0 + $0x8] sm:$0xff]
    %v33 = vpack.c.bf16 %v32, %v31
    %v34 = vld [vmem:[%s1] sm:$0xff]
    %v35 = vld [vmem:[%s1 + $0x8] sm:$0xff]
    %v36 = vld [vmem:[%s1 + $0x10] sm:$0xff]
    %v37 = vld [vmem:[%s1 + $0x18] sm:$0xff]
    %v38 = vld [vmem:[%s1 + $0x20] sm:$0xff]
    %v39 = vld [vmem:[%s1 + $0x28] sm:$0xff]
    %v40 = vld [vmem:[%s1 + $0x30] sm:$0xff]
    %v41 = vld [vmem:[%s1 + $0x38] sm:$0xff]
    %v42 = vld [vmem:[%s1 + $0x40] sm:$0xff]
    %v43 = vld [vmem:[%s1 + $0x48] sm:$0xff]
    %v44 = vld [vmem:[%s1 + $0x50] sm:$0xff]
    %v45 = vld [vmem:[%s1 + $0x58] sm:$0xff]
    %v46 = vld [vmem:[%s1 + $0x60] sm:$0xff]
    %v47 = vld [vmem:[%s1 + $0x68] sm:$0xff]
    %v48 = vld [vmem:[%s1 + $0x70] sm:$0xff]
    %v49 = vld [vmem:[%s1 + $0x78] sm:$0xff]
    %v50 = vpack.c.bf16 %v35, %v34
    %v51 = vpack.c.bf16 %v37, %v36
    %v52 = vpack.c.bf16 %v39, %v38
    %v53 = vpack.c.bf16 %v41, %v40
    %v54 = vpack.c.bf16 %v43, %v42
    %v55 = vpack.c.bf16 %v45, %v44
    %v56 = vpack.c.bf16 %v47, %v46
    %v57 = vpack.c.bf16 %v49, %v48
    %vm58 = vcmask 261120
    %v60 = vsel %vm58, %v33, 0
    %v63 = vsel %vm58, %v50, 0
    %v66 = vsel %vm58, %v51, 0
    %v69 = vsel %vm58, %v52, 0
    %v72 = vsel %vm58, %v53, 0
    %v75 = vsel %vm58, %v54, 0
    %v78 = vsel %vm58, %v55, 0
    %v81 = vsel %vm58, %v56, 0
    %v84 = vsel %vm58, %v57, 0
    %86 = vmatprep.subr.bf16.mxu0 0
    %87 = vmatpush1.bf16.xpose.msra.mxu0 %v63
    %88 = vmatprep.subr.bf16.mxu0 0
    %89 = vmatpush1.bf16.xpose.msra.mxu0 %v66
    %90 = vmatprep.subr.bf16.mxu0 0
    %91 = vmatpush1.bf16.xpose.msra.mxu0 %v69
    %92 = vmatprep.subr.bf16.mxu0 0
    %93 = vmatpush1.bf16.xpose.msra.mxu0 %v72
    %94 = vmatprep.subr.bf16.mxu0 0
    %95 = vmatpush1.bf16.xpose.msra.mxu0 %v75
    %96 = vmatprep.subr.bf16.mxu0 0
    %97 = vmatpush1.bf16.xpose.msra.mxu0 %v78
    %98 = vmatprep.subr.bf16.mxu0 0
    %99 = vmatpush1.bf16.xpose.msra.mxu0 %v81
    %100 = vmatprep.subr.bf16.mxu0 0
    %101 = vmatpush1.bf16.xpose.msra.mxu0 %v84
    %102 = vmatprep.subr.bf16.mxu0 0
    %103 = vmatpush1.bf16.xpose.msra.mxu0 0
    %104 = vmatprep.subr.bf16.mxu0 0
    %105 = vmatpush1.bf16.xpose.msra.mxu0 0
    %106 = vmatprep.subr.bf16.mxu0 0
    %107 = vmatpush1.bf16.xpose.msra.mxu0 0
    %108 = vmatprep.subr.bf16.mxu0 0
    %109 = vmatpush1.bf16.xpose.msra.mxu0 0
    %110 = vmatprep.subr.bf16.mxu0 0
    %111 = vmatpush1.bf16.xpose.msra.mxu0 0
    %112 = vmatprep.subr.bf16.mxu0 0
    %113 = vmatpush1.bf16.xpose.msra.mxu0 0
    %114 = vmatprep.subr.bf16.mxu0 0
    %115 = vmatpush1.bf16.xpose.msra.mxu0 0
    %116 = vmatprep.subr.bf16.mxu0 0
    %117 = vmatpush1.bf16.xpose.msra.mxu0 0
    %118 = vmatprep.mubr.bf16.mxu0 0
    %119 = vmatmul.mubr.bf16.gmra.mrb[0].mxu0 %v60
    %v120 = vpop.f32.mrb[0].mxu0
    %v121 = vadd.f32 0.0, %v120
    %v122 = vpop.f32.mrb[0].mxu0
    %v123 = vpop.f32.mrb[0].mxu0
    %v124 = vadd.f32 0.0, %v123
    %v125 = vpop.f32.mrb[0].mxu0
    %126 = vdwg.mxu0
    %v127 = vadd.f32 %v29, %v121
    %v128 = vadd.f32 %v30, %v124
    %129 = vst [vmem:[#allocation2] sm:$0xff] %v127
    %130 = vst [vmem:[#allocation2 + $0x8] sm:$0xff] %v128
    // Predicated region
    $region18: #{tpu_custom_call.1} parent=1 // pred_check
      %p131 = pneg %p16
    $region19: #{tpu_custom_call.1} parent=1 // pred_check_branch
      %133 = sbr.rel (%p131) target = $region21
    $region20: #{tpu_custom_call.1} parent=1 // pred_region
      %v134 = vld [vmem:[#allocation2] sm:$0xff]
      %v135 = vld [vmem:[#allocation2 + $0x8] sm:$0xff]
      %136 = vst [vmem:[#allocation3] sm:$0xff] %v134
      %137 = vst [vmem:[#allocation3 + $0x8] sm:$0xff] %v135
    $region21: #{tpu_custom_call.1} parent=1 // pred_fallthru
      _
    // Predicated region
    $region22: #{tpu_custom_call.1} parent=1 // pred_check
      _
    $region23: #{tpu_custom_call.1} parent=1 // pred_check_branch
      %139 = sbr.rel (0) target = $region25
    $region24: #{tpu_custom_call.1} parent=1 // pred_region
      %s141 = ssub.s32 256, 256
      %142 = vsyncadd [#allocation4], %s141
      %s143 = sshll.u32 [#allocation3], 4
      %s144 = int_to_ptr.vmem [resolvable:$true] %s143
      %149 = dma.vmem_to_hbm [thread:$0]  %s144, 256, %s3, [#allocation4], 128, 128, 8
    $region25: #{tpu_custom_call.1} parent=1 // pred_fallthru
      _
    // Predicated region
    $region26: #{tpu_custom_call.1} parent=1 // pred_check
      _
    $region27: #{tpu_custom_call.1} parent=1 // pred_check_branch
      %151 = sbr.rel (0) target = $region29
    $region28: #{tpu_custom_call.1} parent=1 // pred_region
      %152 = dma.done [#allocation4], 256
    $region29: #{tpu_custom_call.1} parent=1 // pred_fallthru
      _
    %153 = vsyncpa [#allocation4], 1

</llo_original>
